<compile_context>
chip_gen: v6e
topology: v6e:2x2x1
jax: 0.10.0
libtpu: 0.0.40
codegen_flags: <defaults>
</compile_context>

<pallas_src>
import functools

import jax
import jax.numpy as jnp
from jax import lax
from jax.experimental import pallas as pl
from jax.experimental.pallas import tpu as pltpu

_LANE = 128
_SUBLANE = 8


def _round_up(n, m):
    return ((n + m - 1) // m) * m


def _device_kind():
    try:
        return jax.devices()[0].device_kind.lower()
    except Exception:  # pragma: no cover - defensive
        return ""


def _elementwise_dtype(kind):
    # bf16 VPU/EUP only on v6e / v7x; keep f32 elementwise elsewhere.
    if ("v6" in kind) or ("v7" in kind) or ("7x" in kind):
        return jnp.bfloat16
    return jnp.float32


def _vmem_config(kind):
    """(tile byte budget, vmem_limit_bytes) per TPU generation."""
    if ("v7" in kind) or ("7x" in kind):
        return 36 * 2**20, 44 * 2**20      # 64 MiB physical per core
    if "v6" in kind:
        return 44 * 2**20, 56 * 2**20      # 128 MiB physical, 32 MiB scoped default
    # v5e / v5p / v4 / unknown: stay near the conservative scoped default.
    return 10 * 2**20, 14 * 2**20


def _choose_tiles(B, S, D, Hp, O, *, ew_bytes, budget, multi_core):
    """Pick (tb, ts, cs): batch tile, sequence tile, in-kernel sequence chunk.

    ts is a multiple of cs and <= S; tb/cs are sublane (8) aligned whenever the
    corresponding dim allows it, so the in-kernel reshapes stay free views.
    """
    dp = _round_up(max(D, 1), _LANE)
    op = _round_up(max(O, 1), _LANE)

    # Batch tile: sublane aligned, never larger than B, capped at 128 rows.
    if B <= _SUBLANE:
        tb = B
    else:
        tb = min((B // _SUBLANE) * _SUBLANE, 128)
        if multi_core and B >= 16:
            # v7x: guarantee >= 2 blocks on the 'parallel' axis (2 TensorCores).
            tb = min(tb, max(_SUBLANE, _round_up(pl.cdiv(B, 2), _SUBLANE)))

    # Sequence chunk: ~1024 flattened rows per inner matmul, sublane aligned.
    if S <= _SUBLANE:
        cs = S
    else:
        cs_target = max(_SUBLANE, _round_up(pl.cdiv(1024, tb), _SUBLANE))
        cs = min((S // _SUBLANE) * _SUBLANE, cs_target)

    # VMEM accounting for one grid step (weights assumed double-buffered).
    fixed = 2 * 2 * (D * Hp + Hp * Hp + Hp * op)          # bf16 weights, 2 buffers
    fixed += 2 * 4 * (2 * Hp + op)                        # biases (generous)
    fixed += tb * Hp * 4                                  # f32 accumulator scratch
    fixed += 2 * tb * op * 4                              # output block, 2 buffers
    fixed += 2 * tb * cs * Hp * (4 + ew_bytes)            # h1/h2 chunk temps + slack

    per_chunk_x = 2 * tb * cs * dp * 2                    # bf16 x tile, 2 buffers
    n_chunks = max(1, (budget - fixed) // max(per_chunk_x, 1))
    n_chunks = int(min(n_chunks, max(1, S // cs)))        # keep ts <= S
    ts = cs * n_chunks
    return tb, ts, cs


def mlp_kernel(x_ref, w1_ref, b1_ref, w2_ref, b2_ref, w3_ref, b3_ref,
               o_ref, acc_ref, *, seq_len, seq_tile, chunk, ew_dtype,
               needs_mask):
    s = pl.program_id(1)
    num_s = pl.num_programs(1)

    @pl.when(s == 0)
    def _init():
        acc_ref[...] = jnp.zeros_like(acc_ref)

    tb, _, d = x_ref.shape
    hp = w1_ref.shape[1]

    w1 = w1_ref[...]                                  # bf16, resident
    w2 = w2_ref[...]                                  # bf16, resident
    b1 = b1_ref[...].astype(ew_dtype)
    b2 = b2_ref[...].astype(ew_dtype)

    n_chunks = seq_tile // chunk
    seq_base = s * seq_tile

    def accumulate_chunk(c):
        start = c * chunk
        if not isinstance(start, int):
            start = pl.multiple_of(start, chunk)
        xc = x_ref[:, pl.ds(start, chunk), :]         # (tb, chunk, D) bf16
        x2 = xc.reshape(tb * chunk, d)

        # Layer 1: bf16 MXU inputs, f32 accumulation; elementwise in ew_dtype.
        h1 = jnp.dot(x2, w1, preferred_element_type=jnp.float32)
        h1 = jnp.tanh(h1.astype(ew_dtype) + b1)

        # Layer 2.
        h2 = jnp.dot(h1.astype(jnp.bfloat16), w2,
                     preferred_element_type=jnp.float32)
        h2 = jnp.tanh(h2.astype(ew_dtype) + b2)

        # Bounded per-chunk reduce over the sequence positions (f32).
        h2 = h2.reshape(tb, chunk, hp).astype(jnp.float32)
        if needs_mask:
            pos = seq_base + start + lax.broadcasted_iota(
                jnp.int32, (1, chunk, 1), 1)
            h2 = jnp.where(pos < seq_len, h2, 0.0)
        acc_ref[...] += h2.sum(axis=1)

    if n_chunks == 1:
        accumulate_chunk(0)
    else:
        def body(c, carry):
            accumulate_chunk(c)
            return carry
        lax.fori_loop(0, n_chunks, body, 0, unroll=True)

    @pl.when(s == num_s - 1)
    def _finalize():
        hm = acc_ref[...] * (1.0 / seq_len)           # mean over true S
        logits = jnp.dot(hm.astype(jnp.bfloat16), w3_ref[...],
                         preferred_element_type=jnp.float32) + b3_ref[...]
        m = jnp.max(logits, axis=1, keepdims=True)
        z = logits - m
        lse = jnp.log(jnp.sum(jnp.exp(z), axis=1, keepdims=True))
        o_ref[...] = (z - lse).astype(o_ref.dtype)


def prepare_params(w1, b1, w2, b2, w3, b3, *, lane=_LANE):
    """Zero-pad hidden dim to a 128-lane multiple and cast weights to bf16.

    Zero padding is exact: padded hidden channels are tanh(0 + 0) = 0 and the
    padded rows of W2/W3 only ever multiply those exact zeros.
    """
    h = w1.shape[1]
    hp = max(lane, _round_up(h, lane))
    ph = hp - h
    w1p = jnp.pad(w1, ((0, 0), (0, ph))).astype(jnp.bfloat16)
    b1p = jnp.pad(b1, ((0, 0), (0, ph))).astype(jnp.float32)
    w2p = jnp.pad(w2, ((0, ph), (0, ph))).astype(jnp.bfloat16)
    b2p = jnp.pad(b2, ((0, 0), (0, ph))).astype(jnp.float32)
    w3p = jnp.pad(w3, ((0, ph), (0, 0))).astype(jnp.bfloat16)
    b3p = b3.astype(jnp.float32)
    return w1p, b1p, w2p, b2p, w3p, b3p


def mlp_classifier_forward(x, w1p, b1p, w2p, b2p, w3p, b3p, *, batch_first=True):
    """x: (B, S, D) if batch_first else (S, B, D). Returns (B, O) f32 log-probs."""
    if not batch_first:
        x = jnp.transpose(x, (1, 0, 2))
    # DMA x in bf16: x is the only array scaling with B*S, so this halves the
    # dominant HBM traffic (exact for one-hot inputs). Pass bf16 directly from
    # upstream to avoid even this cast.
    x = x.astype(jnp.bfloat16)
    B, S, D = x.shape
    Hp = w1p.shape[1]
    O = w3p.shape[1]

    kind = _device_kind()
    ew_dtype = _elementwise_dtype(kind)
    budget, vmem_limit = _vmem_config(kind)
    multi_core = ("v7" in kind) or ("7x" in kind)

    tb, ts, cs = _choose_tiles(
        B, S, D, Hp, O, ew_bytes=jnp.dtype(ew_dtype).itemsize,
        budget=budget, multi_core=multi_core)
    grid = (pl.cdiv(B, tb), pl.cdiv(S, ts))
    needs_mask = (S % ts) != 0

    kernel = functools.partial(
        mlp_kernel, seq_len=S, seq_tile=ts, chunk=cs,
        ew_dtype=ew_dtype, needs_mask=needs_mask)

    return pl.pallas_call(
        kernel,
        out_shape=jax.ShapeDtypeStruct((B, O), jnp.float32),
        grid=grid,
        in_specs=[
            pl.BlockSpec((tb, ts, D), lambda b, s: (b, s, 0)),   # x (tiled, bf16)
            pl.BlockSpec((D, Hp), lambda b, s: (0, 0)),          # W1 (resident)
            pl.BlockSpec((1, Hp), lambda b, s: (0, 0)),          # b1
            pl.BlockSpec((Hp, Hp), lambda b, s: (0, 0)),         # W2
            pl.BlockSpec((1, Hp), lambda b, s: (0, 0)),          # b2
            pl.BlockSpec((Hp, O), lambda b, s: (0, 0)),          # W3
            pl.BlockSpec((1, O), lambda b, s: (0, 0)),           # b3
        ],
        out_specs=pl.BlockSpec((tb, O), lambda b, s: (b, 0)),
        scratch_shapes=[pltpu.VMEM((tb, Hp), jnp.float32)],      # mean accumulator
        compiler_params=pltpu.CompilerParams(
            dimension_semantics=("parallel", "arbitrary"),
            vmem_limit_bytes=vmem_limit),
    )(x, w1p, b1p, w2p, b2p, w3p, b3p)


def init_params(key, input_dim, hidden_dim, output_dim):
    """Deterministic nn.Linear-style init; weights stored (in, out)."""
    ks = jax.random.split(key, 6)

    def lin(kw, kb, fan_in, fan_out):
        bound = 1.0 / jnp.sqrt(jnp.asarray(fan_in, jnp.float32))
        w = jax.random.uniform(kw, (fan_in, fan_out), jnp.float32, -bound, bound)
        b = jax.random.uniform(kb, (1, fan_out), jnp.float32, -bound, bound)
        return w, b

    w1, b1 = lin(ks[0], ks[1], input_dim, hidden_dim)
    w2, b2 = lin(ks[2], ks[3], hidden_dim, hidden_dim)
    w3, b3 = lin(ks[4], ks[5], hidden_dim, output_dim)
    return w1, b1, w2, b2, w3, b3


def reference_forward(x, w1, b1, w2, b2, w3, b3, *, mixed=True,
                      ew_dtype=jnp.float32):
    """Pure-JAX reference (PyTorch op order). mixed=True mirrors the kernel's
    precision recipe (bf16 MXU inputs, f32 accumulation, ew_dtype elementwise,
    f32 sequence mean); mixed=False is full f32."""
    xs = jnp.transpose(x, (1, 0, 2)).astype(jnp.float32)     # (S, B, D)
    if not mixed:
        h1 = jnp.tanh(jnp.einsum("sbd,dh->sbh", xs, w1) + b1[None])
        h2 = jnp.tanh(jnp.einsum("sbh,hk->sbk", h1, w2) + b2[None])
        hm = jnp.mean(h2, axis=0)
        logits = hm @ w3 + b3
        return jax.nn.log_softmax(logits, axis=1)

    def mm(a, b):
        return jnp.einsum("...i,ij->...j", a.astype(jnp.bfloat16),
                          b.astype(jnp.bfloat16),
                          preferred_element_type=jnp.float32)

    h1 = jnp.tanh(mm(xs, w1).astype(ew_dtype) + b1[None].astype(ew_dtype))
    h2 = jnp.tanh(mm(h1, w2).astype(ew_dtype) + b2[None].astype(ew_dtype))
    hm = jnp.mean(h2.astype(jnp.float32), axis=0)
    logits = mm(hm, w3) + b3
    return jax.nn.log_softmax(logits.astype(jnp.float32), axis=1)


if __name__ == "__main__":
    B, S = 2, 8                     # batch, sequence length
    input_dim, hidden_dim, output_dim = 16, 32, 4

    key = jax.random.PRNGKey(0)
    kx, kp = jax.random.split(key)
    x = jax.random.normal(kx, (B, S, input_dim), jnp.float32)
    params = init_params(kp, input_dim, hidden_dim, output_dim)
    padded = prepare_params(*params)

    out = mlp_classifier_forward(x, *padded, batch_first=True)
    out = jax.block_until_ready(out)

    ew_dtype = _elementwise_dtype(_device_kind())
    ref_mixed = reference_forward(x, *params, mixed=True, ew_dtype=ew_dtype)
    ref_f32 = reference_forward(x, *params, mixed=False)

    # The mixed reference mirrors the kernel's exact precision recipe; the f32
    # reference is the pure PyTorch math.  Tolerances depend on whether bf16
    # elementwise is enabled on this generation.
    if ew_dtype == jnp.float32:
        tol_mixed, tol_f32 = 1e-3, 5e-2
    else:
        tol_mixed, tol_f32 = 3e-2, 1e-1

    assert out.shape == (B, output_dim)
    assert jnp.allclose(out, ref_mixed, atol=tol_mixed, rtol=tol_mixed), (
        float(jnp.max(jnp.abs(out - ref_mixed))))
    assert jnp.allclose(out, ref_f32, atol=tol_f32, rtol=tol_f32), (
        float(jnp.max(jnp.abs(out - ref_f32))))
    print("KERNEL_OK")
</pallas_src>

<mosaic_0001>
module attributes {stable_mosaic.version = 11 : i64} {
  func.func @mlp_kernel(%arg0: i32, %arg1: i32, %arg2: memref<2x8x16xbf16, #tpu.memory_space<vmem>>, %arg3: memref<16x128xbf16, #tpu.memory_space<vmem>>, %arg4: memref<1x128xf32, #tpu.memory_space<vmem>>, %arg5: memref<128x128xbf16, #tpu.memory_space<vmem>>, %arg6: memref<1x128xf32, #tpu.memory_space<vmem>>, %arg7: memref<128x4xbf16, #tpu.memory_space<vmem>>, %arg8: memref<1x4xf32, #tpu.memory_space<vmem>>, %arg9: memref<2x4xf32, #tpu.memory_space<vmem>>, %arg10: memref<2x128xf32, #tpu.memory_space<vmem>>) attributes {dimension_semantics = [#tpu.dimension_semantics<parallel>, #tpu.dimension_semantics<arbitrary>], iteration_bounds = array<i64: 1, 1>, scalar_prefetch = 0 : i64, scratch_operands = 1 : i64, tpu.core_type = #tpu.core_type<tc>, window_params = [{transform_indices = @transform_0, window_bounds = array<i64: 2, 8, 16>}, {pipeline_mode = #tpu.pipeline_mode<synchronous>, transform_indices = @transform_1, window_bounds = array<i64: 16, 128>}, {pipeline_mode = #tpu.pipeline_mode<synchronous>, transform_indices = @transform_2, window_bounds = array<i64: 1, 128>}, {pipeline_mode = #tpu.pipeline_mode<synchronous>, transform_indices = @transform_3, window_bounds = array<i64: 128, 128>}, {pipeline_mode = #tpu.pipeline_mode<synchronous>, transform_indices = @transform_4, window_bounds = array<i64: 1, 128>}, {pipeline_mode = #tpu.pipeline_mode<synchronous>, transform_indices = @transform_5, window_bounds = array<i64: 128, 4>}, {pipeline_mode = #tpu.pipeline_mode<synchronous>, transform_indices = @transform_6, window_bounds = array<i64: 1, 4>}, {transform_indices = @transform_7, window_bounds = array<i64: 2, 4>}]} {
    %c0_i32 = arith.constant 0 : i32
    %0 = arith.cmpi eq, %arg1, %c0_i32 : i32
    %1 = arith.extui %0 : i1 to i32
    %c0_i32_0 = arith.constant 0 : i32
    %2 = arith.cmpi ne, %1, %c0_i32_0 : i32
    scf.if %2 {
      %cst_19 = arith.constant 0.000000e+00 : f32
      %26 = vector.broadcast %cst_19 : f32 to vector<2x128xf32>
      %c0_20 = arith.constant 0 : index
      %c0_21 = arith.constant 0 : index
      %27 = vector.load %arg10[%c0_20, %c0_21] : memref<2x128xf32, #tpu.memory_space<vmem>>, vector<2x128xf32>
      tpu.vector_store %arg10[%c0_20, %c0_21], %26 {strides = array<i32>} : memref<2x128xf32, #tpu.memory_space<vmem>>, vector<2x128xf32>,
    } else {
    }
    %c0 = arith.constant 0 : index
    %c0_1 = arith.constant 0 : index
    %3 = vector.load %arg3[%c0, %c0_1] : memref<16x128xbf16, #tpu.memory_space<vmem>>, vector<16x128xbf16>
    %c0_2 = arith.constant 0 : index
    %c0_3 = arith.constant 0 : index
    %4 = vector.load %arg5[%c0_2, %c0_3] : memref<128x128xbf16, #tpu.memory_space<vmem>>, vector<128x128xbf16>
    %c0_4 = arith.constant 0 : index
    %c0_5 = arith.constant 0 : index
    %5 = vector.load %arg4[%c0_4, %c0_5] : memref<1x128xf32, #tpu.memory_space<vmem>>, vector<1x128xf32>
    %c0_6 = arith.constant 0 : index
    %c0_7 = arith.constant 0 : index
    %6 = vector.load %arg6[%c0_6, %c0_7] : memref<1x128xf32, #tpu.memory_space<vmem>>, vector<1x128xf32>
    %c0_8 = arith.constant 0 : index
    %c0_9 = arith.constant 0 : index
    %c0_10 = arith.constant 0 : index
    %7 = vector.load %arg2[%c0_8, %c0_9, %c0_10] : memref<2x8x16xbf16, #tpu.memory_space<vmem>>, vector<2x8x16xbf16>
    %8 = vector.shape_cast %7 : vector<2x8x16xbf16> to vector<16x16xbf16>
    %cst = arith.constant dense<0.000000e+00> : vector<16x128xf32>
    %9 = tpu.matmul %8, %3, %cst {dimension_numbers = #tpu.dot_dimension_numbers<[1], [0], [0], [1], [0, 0, 1, 1], [], []>} : vector<16x16xbf16>, vector<16x128xbf16>, vector<16x128xf32> -> vector<16x128xf32>
    %10 = vector.broadcast %5 : vector<1x128xf32> to vector<16x128xf32>
    %11 = arith.addf %9, %10 : vector<16x128xf32>
    %12 = math.tanh %11 : vector<16x128xf32>
    %13 = arith.truncf %12 : vector<16x128xf32> to vector<16x128xbf16>
    %cst_11 = arith.constant dense<0.000000e+00> : vector<16x128xf32>
    %14 = tpu.matmul %13, %4, %cst_11 {dimension_numbers = #tpu.dot_dimension_numbers<[1], [0], [0], [1], [0, 0, 1, 1], [], []>} : vector<16x128xbf16>, vector<128x128xbf16>, vector<16x128xf32> -> vector<16x128xf32>
    %15 = vector.broadcast %6 : vector<1x128xf32> to vector<16x128xf32>
    %16 = arith.addf %14, %15 : vector<16x128xf32>
    %17 = math.tanh %16 : vector<16x128xf32>
    %18 = vector.shape_cast %17 : vector<16x128xf32> to vector<2x8x128xf32>
    %c0_12 = arith.constant 0 : index
    %c0_13 = arith.constant 0 : index
    %19 = vector.load %arg10[%c0_12, %c0_13] : memref<2x128xf32, #tpu.memory_space<vmem>>, vector<2x128xf32>
    %cst_14 = arith.constant dense<0.000000e+00> : vector<2x128xf32>
    %20 = vector.multi_reduction <add>, %18, %cst_14 [1] : vector<2x8x128xf32> to vector<2x128xf32>
    %21 = arith.addf %19, %20 : vector<2x128xf32>
    %c0_15 = arith.constant 0 : index
    %c0_16 = arith.constant 0 : index
    %22 = vector.load %arg10[%c0_15, %c0_16] : memref<2x128xf32, #tpu.memory_space<vmem>>, vector<2x128xf32>
    tpu.vector_store %arg10[%c0_15, %c0_16], %21 {strides = array<i32>} : memref<2x128xf32, #tpu.memory_space<vmem>>, vector<2x128xf32>,
    %c0_i32_17 = arith.constant 0 : i32
    %23 = arith.cmpi eq, %arg1, %c0_i32_17 : i32
    %24 = arith.extui %23 : i1 to i32
    %c0_i32_18 = arith.constant 0 : i32
    %25 = arith.cmpi ne, %24, %c0_i32_18 : i32
    scf.if %25 {
      %c0_19 = arith.constant 0 : index
      %c0_20 = arith.constant 0 : index
      %26 = vector.load %arg10[%c0_19, %c0_20] : memref<2x128xf32, #tpu.memory_space<vmem>>, vector<2x128xf32>
      %cst_21 = arith.constant 1.250000e-01 : f32
      %27 = vector.broadcast %cst_21 : f32 to vector<2x128xf32>
      %28 = arith.mulf %26, %27 : vector<2x128xf32>
      %29 = arith.truncf %28 : vector<2x128xf32> to vector<2x128xbf16>
      %c0_22 = arith.constant 0 : index
      %c0_23 = arith.constant 0 : index
      %30 = vector.load %arg7[%c0_22, %c0_23] : memref<128x4xbf16, #tpu.memory_space<vmem>>, vector<128x4xbf16>
      %cst_24 = arith.constant dense<0.000000e+00> : vector<2x4xf32>
      %31 = tpu.matmul %29, %30, %cst_24 {dimension_numbers = #tpu.dot_dimension_numbers<[1], [0], [0], [1], [0, 0, 1, 1], [], []>} : vector<2x128xbf16>, vector<128x4xbf16>, vector<2x4xf32> -> vector<2x4xf32>
      %c0_25 = arith.constant 0 : index
      %c0_26 = arith.constant 0 : index
      %32 = vector.load %arg8[%c0_25, %c0_26] : memref<1x4xf32, #tpu.memory_space<vmem>>, vector<1x4xf32>
      %33 = vector.broadcast %32 : vector<1x4xf32> to vector<2x4xf32>
      %34 = arith.addf %31, %33 : vector<2x4xf32>
      %cst_27 = arith.constant dense<0xFF800000> : vector<2xf32>
      %35 = vector.multi_reduction <maximumf>, %34, %cst_27 [1] : vector<2x4xf32> to vector<2xf32>
      %36 = vector.shape_cast %35 : vector<2xf32> to vector<2x1xf32>
      %37 = vector.broadcast %36 : vector<2x1xf32> to vector<2x4xf32>
      %38 = arith.subf %34, %37 : vector<2x4xf32>
      %39 = math.exp %38 : vector<2x4xf32>
      %cst_28 = arith.constant dense<0.000000e+00> : vector<2xf32>
      %40 = vector.multi_reduction <add>, %39, %cst_28 [1] : vector<2x4xf32> to vector<2xf32>
      %41 = vector.shape_cast %40 : vector<2xf32> to vector<2x1xf32>
      %42 = math.log %41 : vector<2x1xf32>
      %43 = vector.broadcast %42 : vector<2x1xf32> to vector<2x4xf32>
      %44 = arith.subf %38, %43 : vector<2x4xf32>
      %c0_29 = arith.constant 0 : index
      %c0_30 = arith.constant 0 : index
      %45 = vector.load %arg9[%c0_29, %c0_30] : memref<2x4xf32, #tpu.memory_space<vmem>>, vector<2x4xf32>
      tpu.vector_store %arg9[%c0_29, %c0_30], %44 {strides = array<i32>} : memref<2x4xf32, #tpu.memory_space<vmem>>, vector<2x4xf32>,
    } else {
    }
    return
  }
  func.func @transform_0(%arg0: i32, %arg1: i32) -> (i32, i32, i32) {
    %c0_i32 = arith.constant 0 : i32
    %c0_i32_0 = arith.constant 0 : i32
    return %arg0, %arg1, %c0_i32 : i32, i32, i32
  }
  func.func @transform_1(%arg0: i32, %arg1: i32) -> (i32, i32) {
    %c0_i32 = arith.constant 0 : i32
    %c0_i32_0 = arith.constant 0 : i32
    %c0_i32_1 = arith.constant 0 : i32
    return %c0_i32, %c0_i32_0 : i32, i32
  }
  func.func @transform_2(%arg0: i32, %arg1: i32) -> (i32, i32) {
    %c0_i32 = arith.constant 0 : i32
    %c0_i32_0 = arith.constant 0 : i32
    %c0_i32_1 = arith.constant 0 : i32
    return %c0_i32, %c0_i32_0 : i32, i32
  }
  func.func @transform_3(%arg0: i32, %arg1: i32) -> (i32, i32) {
    %c0_i32 = arith.constant 0 : i32
    %c0_i32_0 = arith.constant 0 : i32
    %c0_i32_1 = arith.constant 0 : i32
    return %c0_i32, %c0_i32_0 : i32, i32
  }
  func.func @transform_4(%arg0: i32, %arg1: i32) -> (i32, i32) {
    %c0_i32 = arith.constant 0 : i32
    %c0_i32_0 = arith.constant 0 : i32
    %c0_i32_1 = arith.constant 0 : i32
    return %c0_i32, %c0_i32_0 : i32, i32
  }
  func.func @transform_5(%arg0: i32, %arg1: i32) -> (i32, i32) {
    %c0_i32 = arith.constant 0 : i32
    %c0_i32_0 = arith.constant 0 : i32
    %c0_i32_1 = arith.constant 0 : i32
    return %c0_i32, %c0_i32_0 : i32, i32
  }
  func.func @transform_6(%arg0: i32, %arg1: i32) -> (i32, i32) {
    %c0_i32 = arith.constant 0 : i32
    %c0_i32_0 = arith.constant 0 : i32
    %c0_i32_1 = arith.constant 0 : i32
    return %c0_i32, %c0_i32_0 : i32, i32
  }
  func.func @transform_7(%arg0: i32, %arg1: i32) -> (i32, i32) {
    %c0_i32 = arith.constant 0 : i32
    %c0_i32_0 = arith.constant 0 : i32
    return %arg0, %c0_i32 : i32, i32
  }
}

</mosaic_0001>

<llo_original>
// kernel: tpu_custom_call.1
$region0: #{tpu_custom_call.1}
  #allocation0 [shape = 'u32[]', space=smem, size = 0x4, offset = 0x4, fixed_abs, tag = 'smem constant byte address 0x4 - core index']
  #allocation1 [shape = 'u32[144,128]{1,0:T(1,128)}', space=vmem, size = 0x12000, scoped, tag = 'internal scratch']
  #allocation2 [shape = 'f32[2,128]{1,0:T(2,128)}', space=vmem, size = 0x400, scoped, tag = 'scratch operand']
  %s0 = inlined_call_operand.hbm [shape: bf16[2,8,16], index: 0, kind: input, shape index: {}]
  %s1 = inlined_call_operand.hbm [shape: bf16[16,128], index: 1, kind: input, shape index: {}]
  %s2 = inlined_call_operand.vmem [shape: f32[1,128], index: 2, kind: input, shape index: {}]
  %s3 = inlined_call_operand.vmem [shape: bf16[128,128], index: 3, kind: input, shape index: {}]
  %s4 = inlined_call_operand.vmem [shape: f32[1,128], index: 4, kind: input, shape index: {}]
  %s5 = inlined_call_operand.vmem [shape: bf16[128,4], index: 5, kind: input, shape index: {}]
  %s6 = inlined_call_operand.vmem [shape: f32[1,4], index: 6, kind: input, shape index: {}]
  %s7 = inlined_call_operand.hbm [shape: f32[2,4], index: 7, kind: output, shape index: {}]
  %s8 = sld [smem:[#allocation0]]
  $region54: #{tpu_custom_call.1} parent=0
    _
  %s10 = ssub.s32 1, %s8
  %s11 = scalar_select 0, %s10, %s8
  $region1: #{tpu_custom_call.1} parent=0
    #allocation3 [shape = 'u8[4096]{0}', space=vmem, size = 0x1000, scoped, tag = 'input window, operand 0, single buffered']
    #allocation4 [shape = 's32[1]{0}', space=sflag, size = 0x4, scoped, tag = 'scoped memory for tpu_custom_call.1']
    #allocation5 [shape = 's32[1]{0}', space=sflag, size = 0x4, scoped, tag = 'scoped memory for tpu_custom_call.1']
    #allocation6 [shape = 'u8[4096]{0}', space=vmem, size = 0x1000, scoped, tag = 'input window, operand 1, single buffered']
    #allocation7 [shape = 's32[1]{0}', space=sflag, size = 0x4, scoped, tag = 'scoped memory for tpu_custom_call.1']
    #allocation8 [shape = 'u8[1024]{0}', space=vmem, size = 0x400, scoped, tag = 'output window, operand 0, single buffered']
    %12 = vsyncpa [#allocation4], 0
    %13 = vsyncpa [#allocation7], 0
    %14 = vsyncpa [#allocation5], 0
    // Predicated region
    $region2: #{tpu_custom_call.1} parent=1 // pred_check
      _
    $region3: #{tpu_custom_call.1} parent=1 // pred_check_branch
      %16 = sbr.rel (0) target = $region5
    $region4: #{tpu_custom_call.1} parent=1 // pred_region
      %s18 = ssub.s32 128, 128
      %19 = vsyncadd [#allocation4], %s18
      %s20 = sshll.u32 [#allocation3], 4
      %s21 = int_to_ptr.vmem [resolvable:$true] %s20
      %26 = dma.hbm_to_vmem [thread:$0]  %s0, 128, %s21, [#allocation4], 64, 64, 4
    $region5: #{tpu_custom_call.1} parent=1 // pred_fallthru
      _
    // Predicated region
    $region6: #{tpu_custom_call.1} parent=1 // pred_check
      _
    $region7: #{tpu_custom_call.1} parent=1 // pred_check_branch
      %28 = sbr.rel (0) target = $region9
    $region8: #{tpu_custom_call.1} parent=1 // pred_region
      %s30 = ssub.s32 128, 128
      %31 = vsyncadd [#allocation7], %s30
      %s32 = sshll.u32 [#allocation6], 4
      %s33 = int_to_ptr.vmem [resolvable:$true] %s32
      %38 = dma.hbm_to_vmem [thread:$0]  %s1, 128, %s33, [#allocation7], 64, 64, 4
    $region9: #{tpu_custom_call.1} parent=1 // pred_fallthru
      _
    // Predicated region
    $region10: #{tpu_custom_call.1} parent=1 // pred_check
      _
    $region11: #{tpu_custom_call.1} parent=1 // pred_check_branch
      %40 = sbr.rel (0) target = $region13
    $region12: #{tpu_custom_call.1} parent=1 // pred_region
      _
    $region13: #{tpu_custom_call.1} parent=1 // pred_fallthru
      _
    // Predicated region
    $region14: #{tpu_custom_call.1} parent=1 // pred_check
      _
    $region15: #{tpu_custom_call.1} parent=1 // pred_check_branch
      %42 = sbr.rel (0) target = $region17
    $region16: #{tpu_custom_call.1} parent=1 // pred_region
      _
    $region17: #{tpu_custom_call.1} parent=1 // pred_fallthru
      _
    // Predicated region
    $region18: #{tpu_custom_call.1} parent=1 // pred_check
      _
    $region19: #{tpu_custom_call.1} parent=1 // pred_check_branch
      %44 = sbr.rel (0) target = $region21
    $region20: #{tpu_custom_call.1} parent=1 // pred_region
      _
    $region21: #{tpu_custom_call.1} parent=1 // pred_fallthru
      _
    // Predicated region
    $region22: #{tpu_custom_call.1} parent=1 // pred_check
      _
    $region23: #{tpu_custom_call.1} parent=1 // pred_check_branch
      %46 = sbr.rel (0) target = $region25
    $region24: #{tpu_custom_call.1} parent=1 // pred_region
      _
    $region25: #{tpu_custom_call.1} parent=1 // pred_fallthru
      _
    // Predicated region
    $region26: #{tpu_custom_call.1} parent=1 // pred_check
      _
    $region27: #{tpu_custom_call.1} parent=1 // pred_check_branch
      %48 = sbr.rel (0) target = $region29
    $region28: #{tpu_custom_call.1} parent=1 // pred_region
      _
    $region29: #{tpu_custom_call.1} parent=1 // pred_fallthru
      _
    // Predicated region
    $region30: #{tpu_custom_call.1} parent=1 // pred_check
      _
    $region31: #{tpu_custom_call.1} parent=1 // pred_check_branch
      %50 = sbr.rel (0) target = $region33
    $region32: #{tpu_custom_call.1} parent=1 // pred_region
      %51 = dma.done [#allocation4], 128
    $region33: #{tpu_custom_call.1} parent=1 // pred_fallthru
      _
    // Predicated region
    $region34: #{tpu_custom_call.1} parent=1 // pred_check
      _
    $region35: #{tpu_custom_call.1} parent=1 // pred_check_branch
      %53 = sbr.rel (0) target = $region37
    $region36: #{tpu_custom_call.1} parent=1 // pred_region
      %54 = dma.done [#allocation7], 128
    $region37: #{tpu_custom_call.1} parent=1 // pred_fallthru
      _
    %p56 = scmp.eq.s32.totalorder 0, 0
    // Predicated region
    $region38: #{tpu_custom_call.1} parent=1 // pred_check
      %p57 = pneg %p56
    $region39: #{tpu_custom_call.1} parent=1 // pred_check_branch
      %59 = sbr.rel (%p57) target = $region41
    $region40: #{tpu_custom_call.1} parent=1 // pred_region
      %60 = vst [vmem:[#allocation2] sm:$0x3] 0.0
    $region41: #{tpu_custom_call.1} parent=1 // pred_fallthru
      _
    %v61 = vld [vmem:[#allocation6] sm:$0xf]
    %v62 = vld [vmem:[#allocation6 + $0x4] sm:$0xf]
    %v63 = vld [vmem:[%s3] sm:$0xf]
    %v64 = vld [vmem:[%s3 + $0x4] sm:$0xf]
    %v65 = vld [vmem:[%s3 + $0x8] sm:$0xf]
    %v66 = vld [vmem:[%s3 + $0xc] sm:$0xf]
    %v67 = vld [vmem:[%s3 + $0x10] sm:$0xf]
    %v68 = vld [vmem:[%s3 + $0x14] sm:$0xf]
    %v69 = vld [vmem:[%s3 + $0x18] sm:$0xf]
    %v70 = vld [vmem:[%s3 + $0x1c] sm:$0xf]
    %v71 = vld [vmem:[%s3 + $0x20] sm:$0xf]
    %v72 = vld [vmem:[%s3 + $0x24] sm:$0xf]
    %v73 = vld [vmem:[%s3 + $0x28] sm:$0xf]
    %v74 = vld [vmem:[%s3 + $0x2c] sm:$0xf]
    %v75 = vld [vmem:[%s3 + $0x30] sm:$0xf]
    %v76 = vld [vmem:[%s3 + $0x34] sm:$0xf]
    %v77 = vld [vmem:[%s3 + $0x38] sm:$0xf]
    %v78 = vld [vmem:[%s3 + $0x3c] sm:$0xf]
    %v79 = vld [vmem:[%s2] sm:$0x1]
    %v80 = vld [vmem:[%s4] sm:$0x1]
    %v81 = vld [vmem:[#allocation3] sm:$0xf]
    %v82 = vld [vmem:[#allocation3 + $0x4] sm:$0xf]
    %v84 = vlaneseq
    %v85 = vshrl.u32 %v84, 7
    %v86 = vsub.s32 0, %v85
    %v87 = vrot.slane %v79, %v86
    %v91 = vunpack.c.l.b16 %v81
    %v92 = vunpack.c.l.b16 %v82
    %v93 = vpack.c.b16 %v92, %v91
    %v96 = vunpack.c.l.b16 %v61
    %v97 = vunpack.c.l.b16 %v62
    %v98 = vpack.c.b16 %v97, %v96
    %vm100 = vcmask 130048
    %v102 = vsel %vm100, %v93, 0
    %104 = vmatprep.subr.bf16.mxu0 0
    %105 = vmatpush1.bf16.msra.mxu0 0
    %106 = vmatprep.subr.bf16.mxu0 0
    %107 = vmatpush1.bf16.msra.mxu0 0
    %108 = vmatprep.subr.bf16.mxu0 0
    %109 = vmatpush1.bf16.msra.mxu0 0
    %110 = vmatprep.subr.bf16.mxu0 0
    %111 = vmatpush1.bf16.msra.mxu0 0
    %112 = vmatprep.subr.bf16.mxu0 0
    %113 = vmatpush1.bf16.msra.mxu0 0
    %114 = vmatprep.subr.bf16.mxu0 0
    %115 = vmatpush1.bf16.msra.mxu0 0
    %116 = vmatprep.subr.bf16.mxu0 0
    %117 = vmatpush1.bf16.msra.mxu0 0
    %118 = vmatprep.subr.bf16.mxu0 0
    %119 = vmatpush1.bf16.msra.mxu0 %v98
    %120 = vmatprep.subr.bf16.mxu0 0
    %121 = vmatpush2.bf16.msra.mxu0 0
    %122 = vmatprep.subr.bf16.mxu0 0
    %123 = vmatpush2.bf16.msra.mxu0 0
    %124 = vmatprep.subr.bf16.mxu0 0
    %125 = vmatpush2.bf16.msra.mxu0 0
    %126 = vmatprep.subr.bf16.mxu0 0
    %127 = vmatpush2.bf16.msra.mxu0 0
    %128 = vmatprep.subr.bf16.mxu0 0
    %129 = vmatpush2.bf16.msra.mxu0 0
    %130 = vmatprep.subr.bf16.mxu0 0
    %131 = vmatpush2.bf16.msra.mxu0 0
    %132 = vmatprep.subr.bf16.mxu0 0
    %133 = vmatpush2.bf16.msra.mxu0 0
    %134 = vmatprep.subr.bf16.mxu0 0
    %135 = vmatpush2.bf16.msra.mxu0 0
    %136 = vmatprep.mubr.bf16.mxu0 0
    %137 = vmatmul.mubr.bf16.gmra.mxu0 %v102
    %v138 = vpop.f32.mrf.mxu0
    %v139 = vadd.f32 %v87, %v138
    %v140 = vpop.f32.mrf.mxu0
    %v141 = vpop.f32.mrf.mxu0
    %v142 = vadd.f32 %v87, %v141
    %v143 = vpop.f32.mrf.mxu0
    %144 = vdwg.mxu0
    %v145 = vtanh.pop %v139
    %v146 = vtanh.pop %v142
    %v147 = vpack.c.bf16 %v146, %v145
    %v149 = vlaneseq
    %v150 = vshrl.u32 %v149, 7
    %v151 = vsub.s32 0, %v150
    %v152 = vrot.slane %v80, %v151
    %v170 = vunpack.c.l.b16 %v63
    %v171 = vunpack.c.l.b16 %v64
    %v172 = vunpack.c.l.b16 %v65
    %v173 = vunpack.c.l.b16 %v66
    %v174 = vunpack.c.l.b16 %v67
    %v175 = vunpack.c.l.b16 %v68
    %v176 = vunpack.c.l.b16 %v69
    %v177 = vunpack.c.l.b16 %v70
    %v178 = vunpack.c.l.b16 %v71
    %v179 = vunpack.c.l.b16 %v72
    %v180 = vunpack.c.l.b16 %v73
    %v181 = vunpack.c.l.b16 %v74
    %v182 = vunpack.c.l.b16 %v75
    %v183 = vunpack.c.l.b16 %v76
    %v184 = vunpack.c.l.b16 %v77
    %v185 = vunpack.c.l.b16 %v78
    %v186 = vpack.c.b16 %v171, %v170
    %v187 = vpack.c.b16 %v173, %v172
    %v188 = vpack.c.b16 %v175, %v174
    %v189 = vpack.c.b16 %v177, %v176
    %v190 = vpack.c.b16 %v179, %v178
    %v191 = vpack.c.b16 %v181, %v180
    %v192 = vpack.c.b16 %v183, %v182
    %v193 = vpack.c.b16 %v185, %v184
    %202 = vmatprep.subr.bf16.mxu0 0
    %203 = vmatpush1.bf16.msra.mxu0 %v193
    %204 = vmatprep.subr.bf16.mxu0 0
    %205 = vmatpush1.bf16.msra.mxu0 %v192
    %206 = vmatprep.subr.bf16.mxu0 0
    %207 = vmatpush1.bf16.msra.mxu0 %v191
    %208 = vmatprep.subr.bf16.mxu0 0
    %209 = vmatpush1.bf16.msra.mxu0 %v190
    %210 = vmatprep.subr.bf16.mxu0 0
    %211 = vmatpush1.bf16.msra.mxu0 %v189
    %212 = vmatprep.subr.bf16.mxu0 0
    %213 = vmatpush1.bf16.msra.mxu0 %v188
    %214 = vmatprep.subr.bf16.mxu0 0
    %215 = vmatpush1.bf16.msra.mxu0 %v187
    %216 = vmatprep.subr.bf16.mxu0 0
    %217 = vmatpush1.bf16.msra.mxu0 %v186
    %218 = vmatprep.subr.bf16.mxu0 0
    %219 = vmatpush2.bf16.msra.mxu0 0
    %220 = vmatprep.subr.bf16.mxu0 0
    %221 = vmatpush2.bf16.msra.mxu0 0
    %222 = vmatprep.subr.bf16.mxu0 0
    %223 = vmatpush2.bf16.msra.mxu0 0
    %224 = vmatprep.subr.bf16.mxu0 0
    %225 = vmatpush2.bf16.msra.mxu0 0
    %226 = vmatprep.subr.bf16.mxu0 0
    %227 = vmatpush2.bf16.msra.mxu0 0
    %228 = vmatprep.subr.bf16.mxu0 0
    %229 = vmatpush2.bf16.msra.mxu0 0
    %230 = vmatprep.subr.bf16.mxu0 0
    %231 = vmatpush2.bf16.msra.mxu0 0
    %232 = vmatprep.subr.bf16.mxu0 0
    %233 = vmatpush2.bf16.msra.mxu0 0
    %234 = vmatprep.mubr.bf16.mxu0 0
    %235 = vmatmul.mubr.bf16.gmra.mxu0 %v147
    %v236 = vpop.f32.mrf.mxu0
    %v237 = vadd.f32 %v152, %v236
    %v238 = vpop.f32.mrf.mxu0
    %v239 = vpop.f32.mrf.mxu0
    %v240 = vadd.f32 %v152, %v239
    %v241 = vpop.f32.mrf.mxu0
    %242 = vdwg.mxu0
    %v243 = vtanh.pop %v237
    %v244 = vtanh.pop %v240
    %v245 = vld [vmem:[#allocation2] sm:$0x3]
    %v246 = vrot.slane %v243, 4
    %v247 = vadd.f32 %v243, %v246
    %v248 = vrot.slane %v247, 2
    %v249 = vadd.f32 %v247, %v248
    %v250 = vrot.slane %v249, 1
    %v251 = vadd.f32 %v249, %v250
    %v252 = vrot.slane %v244, 4
    %v253 = vadd.f32 %v244, %v252
    %v254 = vrot.slane %v253, 2
    %v255 = vadd.f32 %v253, %v254
    %v256 = vrot.slane %v255, 1
    %v257 = vadd.f32 %v255, %v256
    %vm260 = vcmask 1041409
    %v261 = vsel %vm260, %v257, %v251
    %v263 = vadd.f32 %v245, %v261
    %264 = vst [vmem:[#allocation2] sm:$0x3] %v263
    // Predicated region
    $region42: #{tpu_custom_call.1} parent=1 // pred_check
      %p265 = pneg %p56
    $region43: #{tpu_custom_call.1} parent=1 // pred_check_branch
      %267 = sbr.rel (%p265) target = $region45
    $region44: #{tpu_custom_call.1} parent=1 // pred_region
      %v268 = vld [vmem:[#allocation2] sm:$0x3]
      %v269 = vmul.f32 %v268, 0.125
      %v270 = vpack.c.bf16 %v269, %v269
      %v271 = vld [vmem:[%s5] sm:$0xf]
      %v272 = vld [vmem:[%s5 + $0x4] sm:$0xf]
      %v273 = vld [vmem:[%s5 + $0x8] sm:$0xf]
      %v274 = vld [vmem:[%s5 + $0xc] sm:$0xf]
      %v275 = vld [vmem:[%s5 + $0x10] sm:$0xf]
      %v276 = vld [vmem:[%s5 + $0x14] sm:$0xf]
      %v277 = vld [vmem:[%s5 + $0x18] sm:$0xf]
      %v278 = vld [vmem:[%s5 + $0x1c] sm:$0xf]
      %v279 = vld [vmem:[%s5 + $0x20] sm:$0xf]
      %v280 = vld [vmem:[%s5 + $0x24] sm:$0xf]
      %v281 = vld [vmem:[%s5 + $0x28] sm:$0xf]
      %v282 = vld [vmem:[%s5 + $0x2c] sm:$0xf]
      %v283 = vld [vmem:[%s5 + $0x30] sm:$0xf]
      %v284 = vld [vmem:[%s5 + $0x34] sm:$0xf]
      %v285 = vld [vmem:[%s5 + $0x38] sm:$0xf]
      %v286 = vld [vmem:[%s5 + $0x3c] sm:$0xf]
      %v287 = vld [vmem:[%s6] sm:$0x1]
      %v289 = vlaneseq
      %v290 = vshrl.u32 %v289, 7
      %v291 = vsub.s32 0, %v290
      %v292 = vrot.slane %v287, %v291
      %v310 = vunpack.c.l.b16 %v271
      %v311 = vunpack.c.l.b16 %v272
      %v312 = vunpack.c.l.b16 %v273
      %v313 = vunpack.c.l.b16 %v274
      %v314 = vunpack.c.l.b16 %v275
      %v315 = vunpack.c.l.b16 %v276
      %v316 = vunpack.c.l.b16 %v277
      %v317 = vunpack.c.l.b16 %v278
      %v318 = vunpack.c.l.b16 %v279
      %v319 = vunpack.c.l.b16 %v280
      %v320 = vunpack.c.l.b16 %v281
      %v321 = vunpack.c.l.b16 %v282
      %v322 = vunpack.c.l.b16 %v283
      %v323 = vunpack.c.l.b16 %v284
      %v324 = vunpack.c.l.b16 %v285
      %v325 = vunpack.c.l.b16 %v286
      %v326 = vpack.c.b16 %v311, %v310
      %v327 = vpack.c.b16 %v313, %v312
      %v328 = vpack.c.b16 %v315, %v314
      %v329 = vpack.c.b16 %v317, %v316
      %v330 = vpack.c.b16 %v319, %v318
      %v331 = vpack.c.b16 %v321, %v320
      %v332 = vpack.c.b16 %v323, %v322
      %v333 = vpack.c.b16 %v325, %v324
      %342 = vmatprep.subr.bf16.mxu0 0
      %343 = vmatpush1.bf16.msra.mxu0 %v333
      %344 = vmatprep.subr.bf16.mxu0 0
      %345 = vmatpush1.bf16.msra.mxu0 %v332
      %346 = vmatprep.subr.bf16.mxu0 0
      %347 = vmatpush1.bf16.msra.mxu0 %v331
      %348 = vmatprep.subr.bf16.mxu0 0
      %349 = vmatpush1.bf16.msra.mxu0 %v330
      %350 = vmatprep.subr.bf16.mxu0 0
      %351 = vmatpush1.bf16.msra.mxu0 %v329
      %352 = vmatprep.subr.bf16.mxu0 0
      %353 = vmatpush1.bf16.msra.mxu0 %v328
      %354 = vmatprep.subr.bf16.mxu0 0
      %355 = vmatpush1.bf16.msra.mxu0 %v327
      %356 = vmatprep.subr.bf16.mxu0 0
      %357 = vmatpush1.bf16.msra.mxu0 %v326
      %358 = vmatprep.subr.bf16.mxu0 0
      %359 = vmatpush2.bf16.msra.mxu0 0
      %360 = vmatprep.subr.bf16.mxu0 0
      %361 = vmatpush2.bf16.msra.mxu0 0
      %362 = vmatprep.subr.bf16.mxu0 0
      %363 = vmatpush2.bf16.msra.mxu0 0
      %364 = vmatprep.subr.bf16.mxu0 0
      %365 = vmatpush2.bf16.msra.mxu0 0
      %366 = vmatprep.subr.bf16.mxu0 0
      %367 = vmatpush2.bf16.msra.mxu0 0
      %368 = vmatprep.subr.bf16.mxu0 0
      %369 = vmatpush2.bf16.msra.mxu0 0
      %370 = vmatprep.subr.bf16.mxu0 0
      %371 = vmatpush2.bf16.msra.mxu0 0
      %372 = vmatprep.subr.bf16.mxu0 0
      %373 = vmatpush2.bf16.msra.mxu0 0
      %374 = vmatprep.mubr.bf16.mxu0 0
      %375 = vmatmul.mubr.bf16.gmra.mxu0 %v270
      %v376 = vpop.f32.mrf.mxu0
      %v377 = vadd.f32 %v292, %v376
      %v378 = vpop.f32.mrf.mxu0
      %v379 = vpop.f32.mrf.mxu0
      %v380 = vpop.f32.mrf.mxu0
      %381 = vdwg.mxu0
      %vm382 = vcmask 25600
      %v383 = vsel %vm382, %v377, -inf
      %384 = vmax.xlane.f32.xlu0 %v383
      %v385 = vpop.xlane.xlu0 %384
      %v386 = vsub.f32 %v377, %v385
      %v387 = vmul.f32 %v386, 1.442695
      %v388 = vpow.pop %v387
      %v389 = vsel %vm382, %v388, 0.0
      %390 = vadd.xlane.f32.xlu0 %v389
      %v391 = vpop.xlane.xlu0 %390
      %v392 = vlog2.pop %v391
      %v393 = vmul.f32 %v392, 0.6931472
      %v394 = vsub.f32 %v386, %v393
      %395 = vst.msk [vmem:[#allocation8] sm:$0x3] %vm382, %v394
    $region45: #{tpu_custom_call.1} parent=1 // pred_fallthru
      _
    // Predicated region
    $region46: #{tpu_custom_call.1} parent=1 // pred_check
      _
    $region47: #{tpu_custom_call.1} parent=1 // pred_check_branch
      %397 = sbr.rel (0) target = $region49
    $region48: #{tpu_custom_call.1} parent=1 // pred_region
      %s399 = ssub.s32 32, 32
      %400 = vsyncadd [#allocation5], %s399
      %s402 = sshll.u32 [#allocation8], 4
      %s403 = int_to_ptr.vmem [resolvable:$true] %s402
      %405 = dma.vmem_to_hbm [thread:$0]  %s403, 32, %s7, [#allocation5]
    $region49: #{tpu_custom_call.1} parent=1 // pred_fallthru
      _
    // Predicated region
    $region50: #{tpu_custom_call.1} parent=1 // pred_check
      _
    $region51: #{tpu_custom_call.1} parent=1 // pred_check_branch
      %407 = sbr.rel (0) target = $region53
    $region52: #{tpu_custom_call.1} parent=1 // pred_region
      %408 = dma.done [#allocation5], 32
    $region53: #{tpu_custom_call.1} parent=1 // pred_fallthru
      _
    %409 = vsyncpa [#allocation4], 1
    %410 = vsyncpa [#allocation7], 1
    %411 = vsyncpa [#allocation5], 1

</llo_original>
